<compile_context>
chip_gen: v5e
topology: v5e:2x2
jax: 0.10.0
libtpu: 0.0.40
codegen_flags: <defaults>
</compile_context>

<pallas_src>
import math

import jax
import jax.numpy as jnp
from jax.experimental import pallas as pl
from jax.experimental.pallas import tpu as pltpu


_LANE = 512            # lane width of the slab: even, multiple of 128
_MAX_BLOCK_ROWS = 256  # 256 x 512 x 4B = 512 KiB per block buffer


def _modtanh_kernel(b_ref, x_ref, o_ref):
    # b_ref: SMEM (1,) f32 scalar; x_ref / o_ref: VMEM (block_rows, _LANE).
    b = b_ref[0]
    x = x_ref[...].astype(jnp.float32)
    lanes = x.shape[-1]

    sq = x * x
    # Pairs are adjacent lanes (even = re, odd = im); the partner of lane i is
    # lane i^1.  Grab it with two lane rotates + a parity select — XLU work,
    # essentially free next to the HBM-bound data movement.
    nxt = pltpu.roll(sq, shift=lanes - 1, axis=1)   # sq[i+1]  (mod lanes)
    prv = pltpu.roll(sq, shift=1, axis=1)           # sq[i-1]  (mod lanes)
    lane_idx = jax.lax.broadcasted_iota(jnp.int32, x.shape, dimension=1)
    partner_sq = jnp.where((lane_idx & 1) == 0, nxt, prv)

    abs2 = sq + partner_sq                           # |z|^2 (same for both lanes of a pair)
    scale = jnp.tanh(1.0 + b * jax.lax.rsqrt(abs2))  # tanh(1 + b/|z|)
    o_ref[...] = (scale * x).astype(o_ref.dtype)


@jax.jit
def modtanh_pallas(x, b):
    """x: arbitrary-shaped float array with even numel; b: shape-(1,) param."""
    orig_shape = x.shape
    n = x.size
    assert n % 2 == 0, "modTanh needs an even number of elements"
    flat = x.reshape(-1)

    # Lane-dense slab (rows, _LANE): contiguous reshape (no data movement);
    # _LANE is even so (re, im) pairs never straddle a row boundary.
    rows = pl.cdiv(n, _LANE)
    block_rows = min(_MAX_BLOCK_ROWS, rows)
    rows_padded = pl.cdiv(rows, block_rows) * block_rows
    n_padded = rows_padded * _LANE
    if n_padded != n:
        # Pad with ones (keeps |z| finite in dead lanes); sliced off below.
        flat = jnp.pad(flat, (0, n_padded - n), constant_values=1)
    slab = flat.reshape(rows_padded, _LANE)

    out = pl.pallas_call(
        _modtanh_kernel,
        out_shape=jax.ShapeDtypeStruct((rows_padded, _LANE), x.dtype),
        grid=(rows_padded // block_rows,),
        in_specs=[
            pl.BlockSpec(memory_space=pltpu.MemorySpace.SMEM),    # b scalar
            pl.BlockSpec((block_rows, _LANE), lambda i: (i, 0)),  # x tile
        ],
        out_specs=pl.BlockSpec((block_rows, _LANE), lambda i: (i, 0)),
        compiler_params=pltpu.CompilerParams(
            dimension_semantics=("parallel",)),
    )(jnp.asarray(b, jnp.float32).reshape(1), slab)

    out_flat = out.reshape(-1)
    if n_padded != n:
        out_flat = out_flat[:n]
    return out_flat.reshape(orig_shape)


if __name__ == "__main__":
    key = jax.random.PRNGKey(0)
    kb, kx = jax.random.split(key)

    # Parameter b: shape (1,). reset_parameters: std = 1/sqrt(1) = 1,
    # uniform(-std, std) -> deterministic uniform(-1, 1) draw here.
    std = 1.0 / math.sqrt(1.0)
    b = jax.random.uniform(kb, (1,), minval=-std, maxval=std, dtype=jnp.float32)

    # Small NCHW input (even numel -> interleaved complex pairs).
    x = jax.random.normal(kx, (2, 4, 16, 16), dtype=jnp.float32)

    out = jax.block_until_ready(modtanh_pallas(x, b))

    # Pure-JAX reference mirroring the PyTorch forward.
    p = x.reshape(-1, 2)
    absz = jnp.sqrt(p[:, 0] ** 2 + p[:, 1] ** 2)
    ref = (jnp.tanh(1.0 + b[0] / absz)[:, None] * p).reshape(x.shape)

    assert out.shape == x.shape
    assert jnp.allclose(out, ref, atol=1e-5, rtol=1e-5), "mismatch vs reference"
    print("KERNEL_OK")
</pallas_src>

<mosaic_0001>
module attributes {stable_mosaic.version = 11 : i64} {
  func.func @_modtanh_kernel(%arg0: i32, %arg1: memref<1xf32, #tpu.memory_space<smem>>, %arg2: memref<4x512xf32, #tpu.memory_space<vmem>>, %arg3: memref<4x512xf32, #tpu.memory_space<vmem>>) attributes {dimension_semantics = [#tpu.dimension_semantics<parallel>], iteration_bounds = array<i64: 1>, scalar_prefetch = 0 : i64, scratch_operands = 0 : i64, tpu.core_type = #tpu.core_type<tc>, window_params = [{transform_indices = @transform_0, window_bounds = array<i64: 1>}, {transform_indices = @transform_1, window_bounds = array<i64: 4, 512>}, {transform_indices = @transform_2, window_bounds = array<i64: 4, 512>}]} {
    %c0 = arith.constant 0 : index
    %0 = memref.load %arg1[%c0] : memref<1xf32, #tpu.memory_space<smem>>
    %c0_0 = arith.constant 0 : index
    %c0_1 = arith.constant 0 : index
    %1 = vector.load %arg2[%c0_0, %c0_1] : memref<4x512xf32, #tpu.memory_space<vmem>>, vector<4x512xf32>
    %2 = arith.mulf %1, %1 : vector<4x512xf32>
    %c511_i32 = arith.constant 511 : i32
    %3 = tpu.dynamic_rotate %2 by %c511_i32 dim 1 : vector<4x512xf32>, i32 -> vector<4x512xf32>
    %c1_i32 = arith.constant 1 : i32
    %4 = tpu.dynamic_rotate %2 by %c1_i32 dim 1 : vector<4x512xf32>, i32 -> vector<4x512xf32>
    %5 = tpu.iota {dimensions = array<i32: 1>} : vector<4x512xi32>
    %c1_i32_2 = arith.constant 1 : i32
    %6 = vector.broadcast %c1_i32_2 : i32 to vector<4x512xi32>
    %7 = arith.andi %5, %6 : vector<4x512xi32>
    %c0_i32 = arith.constant 0 : i32
    %8 = vector.broadcast %c0_i32 : i32 to vector<4x512xi32>
    %9 = arith.cmpi eq, %7, %8 : vector<4x512xi32>
    %10 = arith.select %9, %3, %4 : vector<4x512xi1>, vector<4x512xf32>
    %11 = arith.addf %2, %10 : vector<4x512xf32>
    %12 = math.rsqrt %11 : vector<4x512xf32>
    %13 = vector.broadcast %0 : f32 to vector<4x512xf32>
    %14 = arith.mulf %13, %12 : vector<4x512xf32>
    %cst = arith.constant 1.000000e+00 : f32
    %15 = vector.broadcast %cst : f32 to vector<4x512xf32>
    %16 = arith.addf %15, %14 : vector<4x512xf32>
    %17 = math.tanh %16 : vector<4x512xf32>
    %18 = arith.mulf %17, %1 : vector<4x512xf32>
    %c0_3 = arith.constant 0 : index
    %c0_4 = arith.constant 0 : index
    %19 = vector.load %arg3[%c0_3, %c0_4] : memref<4x512xf32, #tpu.memory_space<vmem>>, vector<4x512xf32>
    tpu.vector_store %arg3[%c0_3, %c0_4], %18 {strides = array<i32>} : memref<4x512xf32, #tpu.memory_space<vmem>>, vector<4x512xf32>,
    return
  }
  func.func @transform_0(%arg0: i32) -> i32 {
    %c0_i32 = arith.constant 0 : i32
    %c0_i32_0 = arith.constant 0 : i32
    return %c0_i32 : i32
  }
  func.func @transform_1(%arg0: i32) -> (i32, i32) {
    %c0_i32 = arith.constant 0 : i32
    %c0_i32_0 = arith.constant 0 : i32
    return %arg0, %c0_i32 : i32, i32
  }
  func.func @transform_2(%arg0: i32) -> (i32, i32) {
    %c0_i32 = arith.constant 0 : i32
    %c0_i32_0 = arith.constant 0 : i32
    return %arg0, %c0_i32 : i32, i32
  }
}

</mosaic_0001>

<llo_original>
// kernel: modtanh_pallas.1
$region0: #{modtanh_pallas.1}
  #allocation0 [shape = 'u32[]', space=smem, size = 0x4, offset = 0x4, fixed_abs, tag = 'smem constant byte address 0x4 - core index']
  #allocation1 [shape = 'u32[72,128]{1,0:T(1,128)}', space=vmem, size = 0x9000, scoped, tag = 'internal scratch']
  #allocation2 [shape = 'f32[1]{0:T(128)S(6)}', space=smem, size = 0x200, scoped, tag = 'scoped memory for modtanh_pallas.1']
  %s0 = inlined_call_operand.<no memory space> [shape: f32[1], index: 0, kind: input, shape index: {}]
  %s1 = inlined_call_operand.vmem [shape: f32[4,512], index: 1, kind: input, shape index: {}]
  %s2 = inlined_call_operand.vmem [shape: f32[4,512], index: 2, kind: output, shape index: {}]
  %s3 = sld [smem:[#allocation0]]
  $region18: #{modtanh_pallas.1} parent=0
    _
  %s5 = ssub.s32 1, %s3
  %s6 = scalar_select 0, %s5, %s3
  %7 = sst [smem:[#allocation2]] %s0
  // Predicated region
  $region2: #{modtanh_pallas.1} parent=0 // pred_check
    _
  $region3: #{modtanh_pallas.1} parent=0 // pred_check_branch
    %9 = sbr.rel (0) target = $region5
  $region4: #{modtanh_pallas.1} parent=0 // pred_region
    _
  $region5: #{modtanh_pallas.1} parent=0 // pred_fallthru
    _
  // Predicated region
  $region6: #{modtanh_pallas.1} parent=0 // pred_check
    _
  $region7: #{modtanh_pallas.1} parent=0 // pred_check_branch
    %11 = sbr.rel (0) target = $region9
  $region8: #{modtanh_pallas.1} parent=0 // pred_region
    _
  $region9: #{modtanh_pallas.1} parent=0 // pred_fallthru
    _
  %s12 = sld [smem:[#allocation2]]
  %v13 = vld [vmem:[%s1] sm:$0xff]
  %v14 = vld [vmem:[%s1 + $0x8] sm:$0xff]
  %v15 = vmul.f32 %v13, %v13
  %v16 = vmul.f32 %v14, %v14
  %19 = vst [vmem:[#allocation1] ss:$2 sm:$0xff] %v15
  %s20 = scalar_lea.vmem [#allocation1], 16
  %21 = vst [vmem:[%s20] ss:$2 sm:$0xff] %v16
  %v22 = vld.sshfl [vmem:[#allocation1] sm:$0xff pattern:$0x75316420]
  %v23 = vld.sshfl [vmem:[#allocation1 + $0x8] sm:$0xff pattern:$0x75316420]
  %v24 = vld.sshfl [vmem:[#allocation1 + $0x10] sm:$0xff pattern:$0x75316420]
  %v25 = vld.sshfl [vmem:[#allocation1 + $0x18] sm:$0xff pattern:$0x75316420]
  %30 = vrot.lane.b32.xlu0 %v22, 127
  %v31 = vpop.permute.xlu0 %30
  %32 = vrot.lane.b32.xlu0 %v23, 127
  %v33 = vpop.permute.xlu0 %32
  %34 = vrot.lane.b32.xlu0 %v24, 127
  %v35 = vpop.permute.xlu0 %34
  %36 = vrot.lane.b32.xlu0 %v25, 127
  %v37 = vpop.permute.xlu0 %36
  %v38 = vlaneseq
  %v39 = vand.u32 %v38, 127
  %vm40 = vcmp.lt.s32.totalorder %v39, 127
  %v41 = vsel %vm40, %v35, %v37
  %v42 = vsel %vm40, %v33, %v35
  %v43 = vsel %vm40, %v31, %v33
  %v44 = vsel %vm40, %v37, %v31
  %45 = vst [vmem:[#allocation1] ss:$2 sm:$0xff] %v15
  %s46 = scalar_lea.vmem [#allocation1], 16
  %47 = vst [vmem:[%s46] ss:$2 sm:$0xff] %v16
  %v48 = vld.sshfl [vmem:[#allocation1] sm:$0xff pattern:$0x75316420]
  %v49 = vld.sshfl [vmem:[#allocation1 + $0x8] sm:$0xff pattern:$0x75316420]
  %v50 = vld.sshfl [vmem:[#allocation1 + $0x10] sm:$0xff pattern:$0x75316420]
  %v51 = vld.sshfl [vmem:[#allocation1 + $0x18] sm:$0xff pattern:$0x75316420]
  %56 = vrot.lane.b32.xlu0 %v48, 1
  %v57 = vpop.permute.xlu0 %56
  %58 = vrot.lane.b32.xlu0 %v49, 1
  %v59 = vpop.permute.xlu0 %58
  %60 = vrot.lane.b32.xlu0 %v50, 1
  %v61 = vpop.permute.xlu0 %60
  %62 = vrot.lane.b32.xlu0 %v51, 1
  %v63 = vpop.permute.xlu0 %62
  %vm64 = vcmp.lt.s32.totalorder %v39, 1
  %v65 = vsel %vm64, %v61, %v63
  %v66 = vsel %vm64, %v59, %v61
  %v67 = vsel %vm64, %v57, %v59
  %v68 = vsel %vm64, %v63, %v57
  %v69 = vadd.s32 %v39, 128
  %v70 = vadd.s32 %v39, 256
  %v71 = vadd.s32 %v39, 384
  %v72 = vand.u32 %v39, 1
  %v73 = vand.u32 %v69, 1
  %v74 = vand.u32 %v70, 1
  %v75 = vand.u32 %v71, 1
  %vm76 = vcmp.eq.s32.totalorder %v72, 0
  %vm77 = vcmp.eq.s32.totalorder %v73, 0
  %vm78 = vcmp.eq.s32.totalorder %v74, 0
  %vm79 = vcmp.eq.s32.totalorder %v75, 0
  %v80 = vsel %vm76, %v43, %v68
  %v81 = vsel %vm77, %v42, %v67
  %v82 = vsel %vm78, %v41, %v66
  %v83 = vsel %vm79, %v44, %v65
  %v88 = vrot.slane %v81, 4
  %v89 = vrot.slane %v83, 4
  %vm90 = vcmask 1043456
  %v91 = vsel %vm90, %v80, %v88
  %v92 = vsel %vm90, %v82, %v89
  %v95 = vadd.f32 %v15, %v91
  %v96 = vadd.f32 %v16, %v92
  %v97 = vrsqrt.pop %v95
  %v98 = vmul.f32 %v97, %v95
  %v99 = vmul.f32 %v98, %v97
  %v100 = vmul.f32 0.5, %v99
  %v101 = vsub.f32 1.5, %v100
  %v102 = vmul.f32 %v97, %v101
  %vm103 = vweird.f32 %v95
  %vm104 = vweird.f32 %v97
  %vm105 = vmor %vm103, %vm104
  %v106 = vsel %vm105, %v97, %v102
  %v107 = vrsqrt.pop %v96
  %v108 = vmul.f32 %v107, %v96
  %v109 = vmul.f32 %v108, %v107
  %v110 = vmul.f32 0.5, %v109
  %v111 = vsub.f32 1.5, %v110
  %v112 = vmul.f32 %v107, %v111
  %vm113 = vweird.f32 %v96
  %vm114 = vweird.f32 %v107
  %vm115 = vmor %vm113, %vm114
  %v116 = vsel %vm115, %v107, %v112
  %v117 = vstv %s12
  %v118 = vmul.f32 %v117, %v106
  %v119 = vmul.f32 %v117, %v116
  %v120 = vadd.f32 %v118, 1.0
  %v121 = vadd.f32 %v119, 1.0
  %v122 = vtanh.pop %v120
  %v123 = vtanh.pop %v121
  %v124 = vmul.f32 %v122, %v13
  %v125 = vmul.f32 %v123, %v14
  %126 = vst [vmem:[%s2] sm:$0xff] %v124
  %127 = vst [vmem:[%s2 + $0x8] sm:$0xff] %v125
  // Predicated region
  $region10: #{modtanh_pallas.1} parent=0 // pred_check
    _
  $region11: #{modtanh_pallas.1} parent=0 // pred_check_branch
    %129 = sbr.rel (0) target = $region13
  $region12: #{modtanh_pallas.1} parent=0 // pred_region
    _
  $region13: #{modtanh_pallas.1} parent=0 // pred_fallthru
    _
  // Predicated region
  $region14: #{modtanh_pallas.1} parent=0 // pred_check
    _
  $region15: #{modtanh_pallas.1} parent=0 // pred_check_branch
    %131 = sbr.rel (0) target = $region17
  $region16: #{modtanh_pallas.1} parent=0 // pred_region
    _
  $region17: #{modtanh_pallas.1} parent=0 // pred_fallthru
    _

</llo_original>
